<compile_context>
chip_gen: v5e
topology: v5e:2x2
jax: 0.10.0
libtpu: 0.0.40
codegen_flags: <defaults>
</compile_context>

<pallas_src>
import functools
import math

import jax
import jax.numpy as jnp
from jax.experimental import pallas as pl
from jax.experimental.pallas import tpu as pltpu

NUM_LAYERS = 2  # num_stacks in the PyTorch module


def _lstm_opt_kernel(x_ref, h0_ref, c0_ref,
                     w0_ref, b0_ref, w1_ref, b1_ref,
                     wlin_ref, blin_ref,
                     upd_ref, hn_ref, cn_ref,
                     *, p, exp_p, hidden_size):
    H = hidden_size
    cdt = w0_ref.dtype  # MXU operand dtype (f32 or bf16 weights)

    x = x_ref[...]                                            # [D, TB] f32
    # ---- LogAndSign_Preprocess_Gradient (elementwise, VPU/EUP) ----
    log_part = jnp.clip(jnp.log(jnp.abs(x)) * (1.0 / p), -1.0, 1.0)
    sign_part = jnp.clip(exp_p * x, -1.0, 1.0)
    xin = jnp.concatenate([log_part, sign_part], axis=0)      # [2D, TB]

    layer_params = ((w0_ref, b0_ref), (w1_ref, b1_ref))

    # ---- coordinate-wise 2-layer LSTM, single time step ----
    for layer in range(NUM_LAYERS):
        w_ref, b_ref = layer_params[layer]
        h_prev = h0_ref[layer]                                # [H, TB]
        c_prev = c0_ref[layer]                                # [H, TB]
        inp = jnp.concatenate([xin, h_prev], axis=0)          # [K, TB]
        # fused [W_ih | W_hh] @ [x; h]  -> one MXU matmul per layer
        gates = (jnp.dot(w_ref[...], inp.astype(cdt),
                         preferred_element_type=jnp.float32)
                 + b_ref[...])                                # [4H, TB] (i,f,o,g)
        sig = jax.nn.sigmoid(gates[0:3 * H])                  # contiguous sigmoid block
        i_g = sig[0:H]
        f_g = sig[H:2 * H]
        o_g = sig[2 * H:3 * H]
        g_g = jnp.tanh(gates[3 * H:4 * H])                    # contiguous tanh block
        c_new = f_g * c_prev + i_g * g_g
        h_new = o_g * jnp.tanh(c_new)
        hn_ref[layer] = h_new
        cn_ref[layer] = c_new
        xin = h_new

    # ---- Linear head (output_scale already folded into wlin/blin) ----
    upd_ref[...] = (jnp.dot(wlin_ref[...], xin.astype(cdt),
                            preferred_element_type=jnp.float32)
                    + blin_ref[...])                          # [O, TB], lane-dense store


def _pick_batch_tile(B, max_tile=2048):
    """Batch sits on the lane axis, so the tile must be a multiple of 128
    (or the full extent).  Cap so double-buffered tiles stay far under
    v7x's 64 MiB VMEM."""
    if B % 128 != 0:
        return B
    tb = min(B, max_tile)
    tb -= tb % 128
    while B % tb != 0:
        tb -= 128
    return tb


def lstm_optimizer_forward(grads, prev_state, params, *, p=10):
    """JAX wrapper reproducing LSTM_optimizer_Model.forward.

    grads:      [B, D] f32 gradients (PyTorch: input_gradients)
    prev_state: (h, c), each [NUM_LAYERS, H, B] f32 (batch-on-lanes layout,
                kept in this layout across optimizer steps)
    returns:    (update [B, O], (h_next, c_next))
    output_scale is folded into params["w_lin"]/["b_lin"] at init time.
    """
    h0, c0 = prev_state
    B, D = grads.shape
    L, H, _ = h0.shape
    assert L == NUM_LAYERS
    O = params["w_lin"].shape[0]

    grads_t = grads.T                     # [D, B] — one transpose in the wrapper
    TB = _pick_batch_tile(B)
    grid = (pl.cdiv(B, TB),)

    kernel = functools.partial(
        _lstm_opt_kernel, p=float(p),
        exp_p=float(min(math.exp(min(p, 700.0)), 3.0e38)),
        hidden_size=H)

    batch2 = lambda i: (0, i)             # slice only the batch (lane) axis
    batch3 = lambda i: (0, 0, i)
    fixed2 = lambda i: (0, 0)             # weights: same block every step -> resident

    in_specs = [
        pl.BlockSpec((D, TB), batch2),                 # grads^T
        pl.BlockSpec((L, H, TB), batch3),              # h0
        pl.BlockSpec((L, H, TB), batch3),              # c0
        pl.BlockSpec((4 * H, 2 * D + H), fixed2),      # fused W layer 0
        pl.BlockSpec((4 * H, 1), fixed2),              # b layer 0
        pl.BlockSpec((4 * H, 2 * H), fixed2),          # fused W layer 1
        pl.BlockSpec((4 * H, 1), fixed2),              # b layer 1
        pl.BlockSpec((O, H), fixed2),                  # Linear W (scaled)
        pl.BlockSpec((O, 1), fixed2),                  # Linear b (scaled)
    ]
    out_specs = (
        pl.BlockSpec((O, TB), batch2),                 # update^T
        pl.BlockSpec((L, H, TB), batch3),              # h_next
        pl.BlockSpec((L, H, TB), batch3),              # c_next
    )
    out_shape = (
        jax.ShapeDtypeStruct((O, B), jnp.float32),
        jax.ShapeDtypeStruct((L, H, B), jnp.float32),
        jax.ShapeDtypeStruct((L, H, B), jnp.float32),
    )

    wbytes = int(sum(int(v.size) * v.dtype.itemsize for v in params.values()))
    cost = pl.CostEstimate(
        flops=2 * B * (4 * H * (2 * D + H) + 4 * H * (2 * H) + O * H),
        transcendentals=B * (10 * H + 2 * D),
        bytes_accessed=4 * B * (D + 4 * L * H + O) + wbytes,
    )

    upd_t, h_next, c_next = pl.pallas_call(
        kernel,
        out_shape=out_shape,
        grid=grid,
        in_specs=in_specs,
        out_specs=out_specs,
        compiler_params=pltpu.CompilerParams(
            dimension_semantics=("parallel",),      # megacore on v7x, no-op elsewhere
            vmem_limit_bytes=32 * 1024 * 1024),
        cost_estimate=cost,
    )(grads_t, h0, c0,
      params["w0"], params["b0"], params["w1"], params["b1"],
      params["w_lin"], params["b_lin"])

    return upd_t.T, (h_next, c_next)


def init_params(key, input_size, output_size, hidden_size, *,
                output_scale=1.0, weight_dtype=jnp.float32):
    """PyTorch-style U(-1/sqrt(H), 1/sqrt(H)) init, already packed for the kernel:
       fused [W_ih | W_hh] per layer, gate rows in (i, f, o, g) order,
       biases = b_ih + b_hh as [4H, 1], Linear stored [O, H] with output_scale
       folded in.  weight_dtype=jnp.bfloat16 halves weight HBM traffic
       (accumulation stays f32 inside the kernel)."""
    H, D, O = hidden_size, input_size, output_size
    k = 1.0 / math.sqrt(H)
    keys = jax.random.split(key, 8)

    def u(kk, shape):
        return jax.random.uniform(kk, shape, jnp.float32, -k, k)

    return {
        "w0": u(keys[0], (4 * H, 2 * D + H)).astype(weight_dtype),
        "b0": u(keys[1], (4 * H, 1)) + u(keys[2], (4 * H, 1)),
        "w1": u(keys[3], (4 * H, 2 * H)).astype(weight_dtype),
        "b1": u(keys[4], (4 * H, 1)) + u(keys[5], (4 * H, 1)),
        "w_lin": (u(keys[6], (O, H)) * output_scale).astype(weight_dtype),
        "b_lin": u(keys[7], (O, 1)) * output_scale,
    }


def reference_forward(grads, prev_state, params, *, p=10):
    """Pure-JAX reference (same math, standard [B, feature] layout)."""
    h0_lhb, c0_lhb = prev_state
    L, H, B = h0_lhb.shape
    exp_p = float(min(math.exp(min(p, 700.0)), 3.0e38))

    log_part = jnp.clip(jnp.log(jnp.abs(grads)) / p, -1.0, 1.0)
    sign_part = jnp.clip(exp_p * grads, -1.0, 1.0)
    xin = jnp.concatenate([log_part, sign_part], axis=-1)     # [B, 2D]

    h0 = jnp.transpose(h0_lhb, (0, 2, 1))                     # [L, B, H]
    c0 = jnp.transpose(c0_lhb, (0, 2, 1))
    lw = ((params["w0"], params["b0"]), (params["w1"], params["b1"]))
    h_next, c_next = [], []
    for layer in range(NUM_LAYERS):
        w, b = lw[layer]
        inp = jnp.concatenate([xin, h0[layer]], axis=-1)      # [B, K]
        gates = inp @ w.astype(jnp.float32).T + b[:, 0]       # [B, 4H] (i,f,o,g)
        i_g = jax.nn.sigmoid(gates[:, 0:H])
        f_g = jax.nn.sigmoid(gates[:, H:2 * H])
        o_g = jax.nn.sigmoid(gates[:, 2 * H:3 * H])
        g_g = jnp.tanh(gates[:, 3 * H:4 * H])
        c_new = f_g * c0[layer] + i_g * g_g
        h_new = o_g * jnp.tanh(c_new)
        h_next.append(h_new)
        c_next.append(c_new)
        xin = h_new
    upd = xin @ params["w_lin"].astype(jnp.float32).T + params["b_lin"][:, 0]
    h_next = jnp.transpose(jnp.stack(h_next), (0, 2, 1))
    c_next = jnp.transpose(jnp.stack(c_next), (0, 2, 1))
    return upd, (h_next, c_next)


if __name__ == "__main__":
    # Shapes consistent with the module: batchsize=128 (spec), input_size=4
    # -> LSTM input dim 8 after LogAndSign, hidden=32, output_size=4, 2 stacks.
    B, D, H, O = 128, 4, 32, 4
    P, OUTPUT_SCALE = 10, 1.0

    key = jax.random.PRNGKey(0)
    k_grad, k_param = jax.random.split(key)

    grads = jax.random.normal(k_grad, (B, D), jnp.float32)
    h0 = jnp.zeros((NUM_LAYERS, H, B), jnp.float32)
    c0 = jnp.zeros((NUM_LAYERS, H, B), jnp.float32)
    params = init_params(k_param, D, O, H, output_scale=OUTPUT_SCALE)

    update, (h_next, c_next) = lstm_optimizer_forward(grads, (h0, c0), params, p=P)
    jax.block_until_ready((update, h_next, c_next))

    upd_ref, (h_ref, c_ref) = reference_forward(grads, (h0, c0), params, p=P)
    assert jnp.allclose(update, upd_ref, atol=1e-3, rtol=1e-3)
    assert jnp.allclose(h_next, h_ref, atol=1e-3, rtol=1e-3)
    assert jnp.allclose(c_next, c_ref, atol=1e-3, rtol=1e-3)

    print("KERNEL_OK")
</pallas_src>

<mosaic_0001>
module attributes {stable_mosaic.version = 11 : i64} {
  func.func @_lstm_opt_kernel(%arg0: i32, %arg1: memref<4x128xf32, #tpu.memory_space<vmem>>, %arg2: memref<2x32x128xf32, #tpu.memory_space<vmem>>, %arg3: memref<2x32x128xf32, #tpu.memory_space<vmem>>, %arg4: memref<128x40xf32, #tpu.memory_space<vmem>>, %arg5: memref<128x1xf32, #tpu.memory_space<vmem>>, %arg6: memref<128x64xf32, #tpu.memory_space<vmem>>, %arg7: memref<128x1xf32, #tpu.memory_space<vmem>>, %arg8: memref<4x32xf32, #tpu.memory_space<vmem>>, %arg9: memref<4x1xf32, #tpu.memory_space<vmem>>, %arg10: memref<4x128xf32, #tpu.memory_space<vmem>>, %arg11: memref<2x32x128xf32, #tpu.memory_space<vmem>>, %arg12: memref<2x32x128xf32, #tpu.memory_space<vmem>>) attributes {dimension_semantics = [#tpu.dimension_semantics<parallel>], iteration_bounds = array<i64: 1>, scalar_prefetch = 0 : i64, scratch_operands = 0 : i64, tpu.core_type = #tpu.core_type<tc>, window_params = [{transform_indices = @transform_0, window_bounds = array<i64: 4, 128>}, {transform_indices = @transform_1, window_bounds = array<i64: 2, 32, 128>}, {transform_indices = @transform_2, window_bounds = array<i64: 2, 32, 128>}, {pipeline_mode = #tpu.pipeline_mode<synchronous>, transform_indices = @transform_3, window_bounds = array<i64: 128, 40>}, {pipeline_mode = #tpu.pipeline_mode<synchronous>, transform_indices = @transform_4, window_bounds = array<i64: 128, 1>}, {pipeline_mode = #tpu.pipeline_mode<synchronous>, transform_indices = @transform_5, window_bounds = array<i64: 128, 64>}, {pipeline_mode = #tpu.pipeline_mode<synchronous>, transform_indices = @transform_6, window_bounds = array<i64: 128, 1>}, {pipeline_mode = #tpu.pipeline_mode<synchronous>, transform_indices = @transform_7, window_bounds = array<i64: 4, 32>}, {pipeline_mode = #tpu.pipeline_mode<synchronous>, transform_indices = @transform_8, window_bounds = array<i64: 4, 1>}, {transform_indices = @transform_9, window_bounds = array<i64: 4, 128>}, {transform_indices = @transform_10, window_bounds = array<i64: 2, 32, 128>}, {transform_indices = @transform_11, window_bounds = array<i64: 2, 32, 128>}]} {
    %c0 = arith.constant 0 : index
    %c0_0 = arith.constant 0 : index
    %0 = vector.load %arg1[%c0, %c0_0] : memref<4x128xf32, #tpu.memory_space<vmem>>, vector<4x128xf32>
    %1 = math.absf %0 : vector<4x128xf32>
    %2 = math.log %1 : vector<4x128xf32>
    %cst = arith.constant 1.000000e-01 : f32
    %3 = vector.broadcast %cst : f32 to vector<4x128xf32>
    %4 = arith.mulf %2, %3 : vector<4x128xf32>
    %cst_1 = arith.constant -1.000000e+00 : f32
    %cst_2 = arith.constant 1.000000e+00 : f32
    %5 = vector.broadcast %cst_1 : f32 to vector<4x128xf32>
    %6 = arith.maximumf %5, %4 : vector<4x128xf32>
    %7 = vector.broadcast %cst_2 : f32 to vector<4x128xf32>
    %8 = arith.minimumf %7, %6 : vector<4x128xf32>
    %cst_3 = arith.constant 22026.4648 : f32
    %9 = vector.broadcast %cst_3 : f32 to vector<4x128xf32>
    %10 = arith.mulf %9, %0 : vector<4x128xf32>
    %cst_4 = arith.constant -1.000000e+00 : f32
    %cst_5 = arith.constant 1.000000e+00 : f32
    %11 = vector.broadcast %cst_4 : f32 to vector<4x128xf32>
    %12 = arith.maximumf %11, %10 : vector<4x128xf32>
    %13 = vector.broadcast %cst_5 : f32 to vector<4x128xf32>
    %14 = arith.minimumf %13, %12 : vector<4x128xf32>
    %15 = tpu.concatenate %8, %14 in 0 : vector<4x128xf32>, vector<4x128xf32> -> vector<8x128xf32>
    %c0_6 = arith.constant 0 : index
    %c0_7 = arith.constant 0 : index
    %c0_8 = arith.constant 0 : index
    %16 = vector.load %arg2[%c0_6, %c0_7, %c0_8] : memref<2x32x128xf32, #tpu.memory_space<vmem>>, vector<1x32x128xf32>
    %17 = vector.shape_cast %16 : vector<1x32x128xf32> to vector<32x128xf32>
    %c0_9 = arith.constant 0 : index
    %c0_10 = arith.constant 0 : index
    %c0_11 = arith.constant 0 : index
    %18 = vector.load %arg3[%c0_9, %c0_10, %c0_11] : memref<2x32x128xf32, #tpu.memory_space<vmem>>, vector<1x32x128xf32>
    %19 = vector.shape_cast %18 : vector<1x32x128xf32> to vector<32x128xf32>
    %20 = tpu.concatenate %15, %17 in 0 : vector<8x128xf32>, vector<32x128xf32> -> vector<40x128xf32>
    %c0_12 = arith.constant 0 : index
    %c0_13 = arith.constant 0 : index
    %21 = vector.load %arg4[%c0_12, %c0_13] : memref<128x40xf32, #tpu.memory_space<vmem>>, vector<128x40xf32>
    %cst_14 = arith.constant dense<0.000000e+00> : vector<128x128xf32>
    %22 = tpu.matmul %21, %20, %cst_14 {dimension_numbers = #tpu.dot_dimension_numbers<[1], [0], [0], [1], [0, 0, 1, 1], [], []>} : vector<128x40xf32>, vector<40x128xf32>, vector<128x128xf32> -> vector<128x128xf32>
    %c0_15 = arith.constant 0 : index
    %c0_16 = arith.constant 0 : index
    %23 = vector.load %arg5[%c0_15, %c0_16] : memref<128x1xf32, #tpu.memory_space<vmem>>, vector<128x1xf32>
    %24 = vector.broadcast %23 : vector<128x1xf32> to vector<128x128xf32>
    %25 = arith.addf %22, %24 : vector<128x128xf32>
    %26 = vector.extract_strided_slice %25 {offsets = [0, 0], sizes = [96, 128], strides = [1, 1]} : vector<128x128xf32> to vector<96x128xf32>
    %27 = arith.negf %26 : vector<96x128xf32>
    %28 = math.exp %27 : vector<96x128xf32>
    %cst_17 = arith.constant 1.000000e+00 : f32
    %29 = vector.broadcast %cst_17 : f32 to vector<96x128xf32>
    %30 = arith.addf %29, %28 : vector<96x128xf32>
    %31 = arith.divf %29, %30 : vector<96x128xf32>
    %32 = vector.extract_strided_slice %31 {offsets = [0, 0], sizes = [32, 128], strides = [1, 1]} : vector<96x128xf32> to vector<32x128xf32>
    %33 = vector.extract_strided_slice %31 {offsets = [32, 0], sizes = [32, 128], strides = [1, 1]} : vector<96x128xf32> to vector<32x128xf32>
    %34 = vector.extract_strided_slice %31 {offsets = [64, 0], sizes = [32, 128], strides = [1, 1]} : vector<96x128xf32> to vector<32x128xf32>
    %35 = vector.extract_strided_slice %25 {offsets = [96, 0], sizes = [32, 128], strides = [1, 1]} : vector<128x128xf32> to vector<32x128xf32>
    %36 = math.tanh %35 : vector<32x128xf32>
    %37 = arith.mulf %33, %19 : vector<32x128xf32>
    %38 = arith.mulf %32, %36 : vector<32x128xf32>
    %39 = arith.addf %37, %38 : vector<32x128xf32>
    %40 = math.tanh %39 : vector<32x128xf32>
    %41 = arith.mulf %34, %40 : vector<32x128xf32>
    %c0_18 = arith.constant 0 : index
    %c0_19 = arith.constant 0 : index
    %c0_20 = arith.constant 0 : index
    %42 = vector.load %arg11[%c0_18, %c0_19, %c0_20] : memref<2x32x128xf32, #tpu.memory_space<vmem>>, vector<1x32x128xf32>
    %43 = vector.shape_cast %42 : vector<1x32x128xf32> to vector<32x128xf32>
    %44 = vector.shape_cast %41 : vector<32x128xf32> to vector<1x32x128xf32>
    tpu.vector_store %arg11[%c0_18, %c0_19, %c0_20], %44 {strides = array<i32>} : memref<2x32x128xf32, #tpu.memory_space<vmem>>, vector<1x32x128xf32>,
    %c0_21 = arith.constant 0 : index
    %c0_22 = arith.constant 0 : index
    %c0_23 = arith.constant 0 : index
    %45 = vector.load %arg12[%c0_21, %c0_22, %c0_23] : memref<2x32x128xf32, #tpu.memory_space<vmem>>, vector<1x32x128xf32>
    %46 = vector.shape_cast %45 : vector<1x32x128xf32> to vector<32x128xf32>
    %47 = vector.shape_cast %39 : vector<32x128xf32> to vector<1x32x128xf32>
    tpu.vector_store %arg12[%c0_21, %c0_22, %c0_23], %47 {strides = array<i32>} : memref<2x32x128xf32, #tpu.memory_space<vmem>>, vector<1x32x128xf32>,
    %c1 = arith.constant 1 : index
    %c0_24 = arith.constant 0 : index
    %c0_25 = arith.constant 0 : index
    %48 = vector.load %arg2[%c1, %c0_24, %c0_25] : memref<2x32x128xf32, #tpu.memory_space<vmem>>, vector<1x32x128xf32>
    %49 = vector.shape_cast %48 : vector<1x32x128xf32> to vector<32x128xf32>
    %c1_26 = arith.constant 1 : index
    %c0_27 = arith.constant 0 : index
    %c0_28 = arith.constant 0 : index
    %50 = vector.load %arg3[%c1_26, %c0_27, %c0_28] : memref<2x32x128xf32, #tpu.memory_space<vmem>>, vector<1x32x128xf32>
    %51 = vector.shape_cast %50 : vector<1x32x128xf32> to vector<32x128xf32>
    %52 = tpu.concatenate %41, %49 in 0 : vector<32x128xf32>, vector<32x128xf32> -> vector<64x128xf32>
    %c0_29 = arith.constant 0 : index
    %c0_30 = arith.constant 0 : index
    %53 = vector.load %arg6[%c0_29, %c0_30] : memref<128x64xf32, #tpu.memory_space<vmem>>, vector<128x64xf32>
    %cst_31 = arith.constant dense<0.000000e+00> : vector<128x128xf32>
    %54 = tpu.matmul %53, %52, %cst_31 {dimension_numbers = #tpu.dot_dimension_numbers<[1], [0], [0], [1], [0, 0, 1, 1], [], []>} : vector<128x64xf32>, vector<64x128xf32>, vector<128x128xf32> -> vector<128x128xf32>
    %c0_32 = arith.constant 0 : index
    %c0_33 = arith.constant 0 : index
    %55 = vector.load %arg7[%c0_32, %c0_33] : memref<128x1xf32, #tpu.memory_space<vmem>>, vector<128x1xf32>
    %56 = vector.broadcast %55 : vector<128x1xf32> to vector<128x128xf32>
    %57 = arith.addf %54, %56 : vector<128x128xf32>
    %58 = vector.extract_strided_slice %57 {offsets = [0, 0], sizes = [96, 128], strides = [1, 1]} : vector<128x128xf32> to vector<96x128xf32>
    %59 = arith.negf %58 : vector<96x128xf32>
    %60 = math.exp %59 : vector<96x128xf32>
    %cst_34 = arith.constant 1.000000e+00 : f32
    %61 = vector.broadcast %cst_34 : f32 to vector<96x128xf32>
    %62 = arith.addf %61, %60 : vector<96x128xf32>
    %63 = arith.divf %61, %62 : vector<96x128xf32>
    %64 = vector.extract_strided_slice %63 {offsets = [0, 0], sizes = [32, 128], strides = [1, 1]} : vector<96x128xf32> to vector<32x128xf32>
    %65 = vector.extract_strided_slice %63 {offsets = [32, 0], sizes = [32, 128], strides = [1, 1]} : vector<96x128xf32> to vector<32x128xf32>
    %66 = vector.extract_strided_slice %63 {offsets = [64, 0], sizes = [32, 128], strides = [1, 1]} : vector<96x128xf32> to vector<32x128xf32>
    %67 = vector.extract_strided_slice %57 {offsets = [96, 0], sizes = [32, 128], strides = [1, 1]} : vector<128x128xf32> to vector<32x128xf32>
    %68 = math.tanh %67 : vector<32x128xf32>
    %69 = arith.mulf %65, %51 : vector<32x128xf32>
    %70 = arith.mulf %64, %68 : vector<32x128xf32>
    %71 = arith.addf %69, %70 : vector<32x128xf32>
    %72 = math.tanh %71 : vector<32x128xf32>
    %73 = arith.mulf %66, %72 : vector<32x128xf32>
    %c1_35 = arith.constant 1 : index
    %c0_36 = arith.constant 0 : index
    %c0_37 = arith.constant 0 : index
    %74 = vector.load %arg11[%c1_35, %c0_36, %c0_37] : memref<2x32x128xf32, #tpu.memory_space<vmem>>, vector<1x32x128xf32>
    %75 = vector.shape_cast %74 : vector<1x32x128xf32> to vector<32x128xf32>
    %76 = vector.shape_cast %73 : vector<32x128xf32> to vector<1x32x128xf32>
    tpu.vector_store %arg11[%c1_35, %c0_36, %c0_37], %76 {strides = array<i32>} : memref<2x32x128xf32, #tpu.memory_space<vmem>>, vector<1x32x128xf32>,
    %c1_38 = arith.constant 1 : index
    %c0_39 = arith.constant 0 : index
    %c0_40 = arith.constant 0 : index
    %77 = vector.load %arg12[%c1_38, %c0_39, %c0_40] : memref<2x32x128xf32, #tpu.memory_space<vmem>>, vector<1x32x128xf32>
    %78 = vector.shape_cast %77 : vector<1x32x128xf32> to vector<32x128xf32>
    %79 = vector.shape_cast %71 : vector<32x128xf32> to vector<1x32x128xf32>
    tpu.vector_store %arg12[%c1_38, %c0_39, %c0_40], %79 {strides = array<i32>} : memref<2x32x128xf32, #tpu.memory_space<vmem>>, vector<1x32x128xf32>,
    %c0_41 = arith.constant 0 : index
    %c0_42 = arith.constant 0 : index
    %80 = vector.load %arg8[%c0_41, %c0_42] : memref<4x32xf32, #tpu.memory_space<vmem>>, vector<4x32xf32>
    %cst_43 = arith.constant dense<0.000000e+00> : vector<4x128xf32>
    %81 = tpu.matmul %80, %73, %cst_43 {dimension_numbers = #tpu.dot_dimension_numbers<[1], [0], [0], [1], [0, 0, 1, 1], [], []>} : vector<4x32xf32>, vector<32x128xf32>, vector<4x128xf32> -> vector<4x128xf32>
    %c0_44 = arith.constant 0 : index
    %c0_45 = arith.constant 0 : index
    %82 = vector.load %arg9[%c0_44, %c0_45] : memref<4x1xf32, #tpu.memory_space<vmem>>, vector<4x1xf32>
    %83 = vector.broadcast %82 : vector<4x1xf32> to vector<4x128xf32>
    %84 = arith.addf %81, %83 : vector<4x128xf32>
    %c0_46 = arith.constant 0 : index
    %c0_47 = arith.constant 0 : index
    %85 = vector.load %arg10[%c0_46, %c0_47] : memref<4x128xf32, #tpu.memory_space<vmem>>, vector<4x128xf32>
    tpu.vector_store %arg10[%c0_46, %c0_47], %84 {strides = array<i32>} : memref<4x128xf32, #tpu.memory_space<vmem>>, vector<4x128xf32>,
    return
  }
  func.func @transform_0(%arg0: i32) -> (i32, i32) {
    %c0_i32 = arith.constant 0 : i32
    %c0_i32_0 = arith.constant 0 : i32
    return %c0_i32, %arg0 : i32, i32
  }
  func.func @transform_1(%arg0: i32) -> (i32, i32, i32) {
    %c0_i32 = arith.constant 0 : i32
    %c0_i32_0 = arith.constant 0 : i32
    %c0_i32_1 = arith.constant 0 : i32
    return %c0_i32, %c0_i32_0, %arg0 : i32, i32, i32
  }
  func.func @transform_2(%arg0: i32) -> (i32, i32, i32) {
    %c0_i32 = arith.constant 0 : i32
    %c0_i32_0 = arith.constant 0 : i32
    %c0_i32_1 = arith.constant 0 : i32
    return %c0_i32, %c0_i32_0, %arg0 : i32, i32, i32
  }
  func.func @transform_3(%arg0: i32) -> (i32, i32) {
    %c0_i32 = arith.constant 0 : i32
    %c0_i32_0 = arith.constant 0 : i32
    %c0_i32_1 = arith.constant 0 : i32
    return %c0_i32, %c0_i32_0 : i32, i32
  }
  func.func @transform_4(%arg0: i32) -> (i32, i32) {
    %c0_i32 = arith.constant 0 : i32
    %c0_i32_0 = arith.constant 0 : i32
    %c0_i32_1 = arith.constant 0 : i32
    return %c0_i32, %c0_i32_0 : i32, i32
  }
  func.func @transform_5(%arg0: i32) -> (i32, i32) {
    %c0_i32 = arith.constant 0 : i32
    %c0_i32_0 = arith.constant 0 : i32
    %c0_i32_1 = arith.constant 0 : i32
    return %c0_i32, %c0_i32_0 : i32, i32
  }
  func.func @transform_6(%arg0: i32) -> (i32, i32) {
    %c0_i32 = arith.constant 0 : i32
    %c0_i32_0 = arith.constant 0 : i32
    %c0_i32_1 = arith.constant 0 : i32
    return %c0_i32, %c0_i32_0 : i32, i32
  }
  func.func @transform_7(%arg0: i32) -> (i32, i32) {
    %c0_i32 = arith.constant 0 : i32
    %c0_i32_0 = arith.constant 0 : i32
    %c0_i32_1 = arith.constant 0 : i32
    return %c0_i32, %c0_i32_0 : i32, i32
  }
  func.func @transform_8(%arg0: i32) -> (i32, i32) {
    %c0_i32 = arith.constant 0 : i32
    %c0_i32_0 = arith.constant 0 : i32
    %c0_i32_1 = arith.constant 0 : i32
    return %c0_i32, %c0_i32_0 : i32, i32
  }
  func.func @transform_9(%arg0: i32) -> (i32, i32) {
    %c0_i32 = arith.constant 0 : i32
    %c0_i32_0 = arith.constant 0 : i32
    return %c0_i32, %arg0 : i32, i32
  }
  func.func @transform_10(%arg0: i32) -> (i32, i32, i32) {
    %c0_i32 = arith.constant 0 : i32
    %c0_i32_0 = arith.constant 0 : i32
    %c0_i32_1 = arith.constant 0 : i32
    return %c0_i32, %c0_i32_0, %arg0 : i32, i32, i32
  }
  func.func @transform_11(%arg0: i32) -> (i32, i32, i32) {
    %c0_i32 = arith.constant 0 : i32
    %c0_i32_0 = arith.constant 0 : i32
    %c0_i32_1 = arith.constant 0 : i32
    return %c0_i32, %c0_i32_0, %arg0 : i32, i32, i32
  }
}

</mosaic_0001>

<llo_original>
// kernel: tpu_custom_call.1
$region0: #{tpu_custom_call.1}
  #allocation0 [shape = 'u32[]', space=smem, size = 0x4, offset = 0x4, fixed_abs, tag = 'smem constant byte address 0x4 - core index']
  #allocation1 [shape = 'u32[72,128]{1,0:T(1,128)}', space=vmem, size = 0x9000, scoped, tag = 'internal scratch']
  %s0 = inlined_call_operand.vmem [shape: f32[4,128], index: 0, kind: input, shape index: {}]
  %s1 = inlined_call_operand.vmem [shape: f32[2,32,128], index: 1, kind: input, shape index: {}]
  %s2 = inlined_call_operand.vmem [shape: f32[2,32,128], index: 2, kind: input, shape index: {}]
  %s3 = inlined_call_operand.vmem [shape: f32[128,40], index: 3, kind: input, shape index: {}]
  %s4 = inlined_call_operand.vmem [shape: f32[128,1], index: 4, kind: input, shape index: {}]
  %s5 = inlined_call_operand.vmem [shape: f32[128,64], index: 5, kind: input, shape index: {}]
  %s6 = inlined_call_operand.vmem [shape: f32[128,1], index: 6, kind: input, shape index: {}]
  %s7 = inlined_call_operand.vmem [shape: f32[4,32], index: 7, kind: input, shape index: {}]
  %s8 = inlined_call_operand.vmem [shape: f32[4,1], index: 8, kind: input, shape index: {}]
  %s9 = inlined_call_operand.hbm [shape: f32[4,128], index: 9, kind: output, shape index: {0}]
  %s10 = inlined_call_operand.hbm [shape: f32[2,32,128], index: 10, kind: output, shape index: {1}]
  %s11 = inlined_call_operand.hbm [shape: f32[2,32,128], index: 11, kind: output, shape index: {2}]
  %12 = xla_tuple %s9, %s10, %s11
  %s13 = sld [smem:[#allocation0]]
  $region62: #{tpu_custom_call.1} parent=0
    _
  %s15 = ssub.s32 1, %s13
  %s16 = scalar_select 0, %s15, %s13
  $region1: #{tpu_custom_call.1} parent=0
    #allocation2 [shape = 'u8[2048]{0}', space=vmem, size = 0x800, scoped, tag = 'output window, operand 0, single buffered']
    #allocation3 [shape = 's32[1]{0}', space=sflag, size = 0x4, scoped, tag = 'scoped memory for tpu_custom_call.1']
    #allocation4 [shape = 'u8[32768]{0}', space=vmem, size = 0x8000, scoped, tag = 'output window, operand 1, single buffered']
    #allocation5 [shape = 's32[1]{0}', space=sflag, size = 0x4, scoped, tag = 'scoped memory for tpu_custom_call.1']
    #allocation6 [shape = 'u8[32768]{0}', space=vmem, size = 0x8000, scoped, tag = 'output window, operand 2, single buffered']
    %17 = vsyncpa [#allocation3], 0
    %18 = vsyncpa [#allocation5], 0
    // Predicated region
    $region2: #{tpu_custom_call.1} parent=1 // pred_check
      _
    $region3: #{tpu_custom_call.1} parent=1 // pred_check_branch
      %20 = sbr.rel (0) target = $region5
    $region4: #{tpu_custom_call.1} parent=1 // pred_region
      _
    $region5: #{tpu_custom_call.1} parent=1 // pred_fallthru
      _
    // Predicated region
    $region6: #{tpu_custom_call.1} parent=1 // pred_check
      _
    $region7: #{tpu_custom_call.1} parent=1 // pred_check_branch
      %22 = sbr.rel (0) target = $region9
    $region8: #{tpu_custom_call.1} parent=1 // pred_region
      _
    $region9: #{tpu_custom_call.1} parent=1 // pred_fallthru
      _
    // Predicated region
    $region10: #{tpu_custom_call.1} parent=1 // pred_check
      _
    $region11: #{tpu_custom_call.1} parent=1 // pred_check_branch
      %24 = sbr.rel (0) target = $region13
    $region12: #{tpu_custom_call.1} parent=1 // pred_region
      _
    $region13: #{tpu_custom_call.1} parent=1 // pred_fallthru
      _
    // Predicated region
    $region14: #{tpu_custom_call.1} parent=1 // pred_check
      _
    $region15: #{tpu_custom_call.1} parent=1 // pred_check_branch
      %26 = sbr.rel (0) target = $region17
    $region16: #{tpu_custom_call.1} parent=1 // pred_region
      _
    $region17: #{tpu_custom_call.1} parent=1 // pred_fallthru
      _
    // Predicated region
    $region18: #{tpu_custom_call.1} parent=1 // pred_check
      _
    $region19: #{tpu_custom_call.1} parent=1 // pred_check_branch
      %28 = sbr.rel (0) target = $region21
    $region20: #{tpu_custom_call.1} parent=1 // pred_region
      _
    $region21: #{tpu_custom_call.1} parent=1 // pred_fallthru
      _
    // Predicated region
    $region22: #{tpu_custom_call.1} parent=1 // pred_check
      _
    $region23: #{tpu_custom_call.1} parent=1 // pred_check_branch
      %30 = sbr.rel (0) target = $region25
    $region24: #{tpu_custom_call.1} parent=1 // pred_region
      _
    $region25: #{tpu_custom_call.1} parent=1 // pred_fallthru
      _
    // Predicated region
    $region26: #{tpu_custom_call.1} parent=1 // pred_check
      _
    $region27: #{tpu_custom_call.1} parent=1 // pred_check_branch
      %32 = sbr.rel (0) target = $region29
    $region28: #{tpu_custom_call.1} parent=1 // pred_region
      _
    $region29: #{tpu_custom_call.1} parent=1 // pred_fallthru
      _
    // Predicated region
    $region30: #{tpu_custom_call.1} parent=1 // pred_check
      _
    $region31: #{tpu_custom_call.1} parent=1 // pred_check_branch
      %34 = sbr.rel (0) target = $region33
    $region32: #{tpu_custom_call.1} parent=1 // pred_region
      _
    $region33: #{tpu_custom_call.1} parent=1 // pred_fallthru
      _
    // Predicated region
    $region34: #{tpu_custom_call.1} parent=1 // pred_check
      _
    $region35: #{tpu_custom_call.1} parent=1 // pred_check_branch
      %36 = sbr.rel (0) target = $region37
    $region36: #{tpu_custom_call.1} parent=1 // pred_region
      _
    $region37: #{tpu_custom_call.1} parent=1 // pred_fallthru
      _
    %v37 = vld [vmem:[%s0] sm:$0xf]
    %v38 = vand.u32 2147483647, %v37
    %v39 = vlog2.pop %v38
    %v40 = vmul.f32 %v39, 0.6931472
    %v41 = vmul.f32 %v40, 0.1
    %v42 = vmax.f32 %v41, -1.0
    %v43 = vmin.f32 %v42, 1.0
    %v44 = vmul.f32 %v37, 22026.465
    %v45 = vmax.f32 %v44, -1.0
    %v46 = vmin.f32 %v45, 1.0
    %v48 = vrot.slane %v46, 4
    %vm50 = vcmask 1043456
    %v51 = vsel %vm50, %v43, %v48
    %v52 = vld [vmem:[%s1] sm:$0xff]
    %v53 = vld [vmem:[%s1 + $0x8] sm:$0xff]
    %v54 = vld [vmem:[%s1 + $0x10] sm:$0xff]
    %v55 = vld [vmem:[%s1 + $0x18] sm:$0xff]
    %v56 = vld [vmem:[%s2] sm:$0xff]
    %v57 = vld [vmem:[%s2 + $0x8] sm:$0xff]
    %v58 = vld [vmem:[%s2 + $0x10] sm:$0xff]
    %v59 = vld [vmem:[%s2 + $0x18] sm:$0xff]
    %v60 = vld [vmem:[%s3] sm:$0xff]
    %v61 = vld [vmem:[%s3 + $0x8] sm:$0xff]
    %v62 = vld [vmem:[%s3 + $0x10] sm:$0xff]
    %v63 = vld [vmem:[%s3 + $0x18] sm:$0xff]
    %v64 = vld [vmem:[%s3 + $0x20] sm:$0xff]
    %v65 = vld [vmem:[%s3 + $0x28] sm:$0xff]
    %v66 = vld [vmem:[%s3 + $0x30] sm:$0xff]
    %v67 = vld [vmem:[%s3 + $0x38] sm:$0xff]
    %v68 = vld [vmem:[%s3 + $0x40] sm:$0xff]
    %v69 = vld [vmem:[%s3 + $0x48] sm:$0xff]
    %v70 = vld [vmem:[%s3 + $0x50] sm:$0xff]
    %v71 = vld [vmem:[%s3 + $0x58] sm:$0xff]
    %v72 = vld [vmem:[%s3 + $0x60] sm:$0xff]
    %v73 = vld [vmem:[%s3 + $0x68] sm:$0xff]
    %v74 = vld [vmem:[%s3 + $0x70] sm:$0xff]
    %v75 = vld [vmem:[%s3 + $0x78] sm:$0xff]
    %v76 = vld [vmem:[%s4] sm:$0xff]
    %v77 = vld [vmem:[%s4 + $0x8] sm:$0xff]
    %v78 = vld [vmem:[%s4 + $0x10] sm:$0xff]
    %v79 = vld [vmem:[%s4 + $0x18] sm:$0xff]
    %v80 = vld [vmem:[%s4 + $0x20] sm:$0xff]
    %v81 = vld [vmem:[%s4 + $0x28] sm:$0xff]
    %v82 = vld [vmem:[%s4 + $0x30] sm:$0xff]
    %v83 = vld [vmem:[%s4 + $0x38] sm:$0xff]
    %v84 = vld [vmem:[%s4 + $0x40] sm:$0xff]
    %v85 = vld [vmem:[%s4 + $0x48] sm:$0xff]
    %v86 = vld [vmem:[%s4 + $0x50] sm:$0xff]
    %v87 = vld [vmem:[%s4 + $0x58] sm:$0xff]
    %v88 = vld [vmem:[%s4 + $0x60] sm:$0xff]
    %v89 = vld [vmem:[%s4 + $0x68] sm:$0xff]
    %v90 = vld [vmem:[%s4 + $0x70] sm:$0xff]
    %v91 = vld [vmem:[%s4 + $0x78] sm:$0xff]
    %93 = vset.pattern.permute.xlu0 0
    %94 = vperm.xlu0 %93, %v76
    %v95 = vpop.permute.xlu0 %94
    %98 = vset.pattern.permute.xlu0 0
    %99 = vperm.xlu0 %98, %v77
    %v100 = vpop.permute.xlu0 %99
    %103 = vset.pattern.permute.xlu0 0
    %104 = vperm.xlu0 %103, %v78
    %v105 = vpop.permute.xlu0 %104
    %108 = vset.pattern.permute.xlu0 0
    %109 = vperm.xlu0 %108, %v79
    %v110 = vpop.permute.xlu0 %109
    %113 = vset.pattern.permute.xlu0 0
    %114 = vperm.xlu0 %113, %v80
    %v115 = vpop.permute.xlu0 %114
    %118 = vset.pattern.permute.xlu0 0
    %119 = vperm.xlu0 %118, %v81
    %v120 = vpop.permute.xlu0 %119
    %123 = vset.pattern.permute.xlu0 0
    %124 = vperm.xlu0 %123, %v82
    %v125 = vpop.permute.xlu0 %124
    %128 = vset.pattern.permute.xlu0 0
    %129 = vperm.xlu0 %128, %v83
    %v130 = vpop.permute.xlu0 %129
    %133 = vset.pattern.permute.xlu0 0
    %134 = vperm.xlu0 %133, %v84
    %v135 = vpop.permute.xlu0 %134
    %138 = vset.pattern.permute.xlu0 0
    %139 = vperm.xlu0 %138, %v85
    %v140 = vpop.permute.xlu0 %139
    %143 = vset.pattern.permute.xlu0 0
    %144 = vperm.xlu0 %143, %v86
    %v145 = vpop.permute.xlu0 %144
    %148 = vset.pattern.permute.xlu0 0
    %149 = vperm.xlu0 %148, %v87
    %v150 = vpop.permute.xlu0 %149
    %153 = vset.pattern.permute.xlu0 0
    %154 = vperm.xlu0 %153, %v88
    %v155 = vpop.permute.xlu0 %154
    %158 = vset.pattern.permute.xlu0 0
    %159 = vperm.xlu0 %158, %v89
    %v160 = vpop.permute.xlu0 %159
    %163 = vset.pattern.permute.xlu0 0
    %164 = vperm.xlu0 %163, %v90
    %v165 = vpop.permute.xlu0 %164
    %168 = vset.pattern.permute.xlu0 0
    %169 = vperm.xlu0 %168, %v91
    %v170 = vpop.permute.xlu0 %169
    %vm172 = vcmask 326656
    %v174 = vsel %vm172, %v60, 0
    %v177 = vsel %vm172, %v61, 0
    %v180 = vsel %vm172, %v62, 0
    %v183 = vsel %vm172, %v63, 0
    %v186 = vsel %vm172, %v64, 0
    %v189 = vsel %vm172, %v65, 0
    %v192 = vsel %vm172, %v66, 0
    %v195 = vsel %vm172, %v67, 0
    %v198 = vsel %vm172, %v68, 0
    %v201 = vsel %vm172, %v69, 0
    %v204 = vsel %vm172, %v70, 0
    %v207 = vsel %vm172, %v71, 0
    %v210 = vsel %vm172, %v72, 0
    %v213 = vsel %vm172, %v73, 0
    %v216 = vsel %vm172, %v74, 0
    %v219 = vsel %vm172, %v75, 0
    %221 = vmatpush.msra.mxu0 0.0
    %222 = vmatpush.msra.mxu0 0.0
    %223 = vmatpush.msra.mxu0 0.0
    %224 = vmatpush.msra.mxu0 0.0
    %225 = vmatpush.msra.mxu0 0.0
    %226 = vmatpush.msra.mxu0 0.0
    %227 = vmatpush.msra.mxu0 0.0
    %228 = vmatpush.msra.mxu0 0.0
    %229 = vmatpush.msra.mxu0 0.0
    %230 = vmatpush.msra.mxu0 0.0
    %231 = vmatpush.msra.mxu0 0.0
    %232 = vmatpush.msra.mxu0 %v55
    %233 = vmatpush.msra.mxu0 %v54
    %234 = vmatpush.msra.mxu0 %v53
    %235 = vmatpush.msra.mxu0 %v52
    %236 = vmatpush.msra.mxu0 %v51
    %237 = vmatmul.f32.gmra.mxu0 %v174
    %v238 = vpop.f32.mrf.mxu0
    %v239 = vadd.f32 %v95, %v238
    %240 = vmatmul.f32.gmra.mxu0 %v177
    %v241 = vpop.f32.mrf.mxu0
    %v242 = vadd.f32 %v100, %v241
    %243 = vmatmul.f32.gmra.mxu0 %v180
    %v244 = vpop.f32.mrf.mxu0
    %v245 = vadd.f32 %v105, %v244
    %246 = vmatmul.f32.gmra.mxu0 %v183
    %v247 = vpop.f32.mrf.mxu0
    %v248 = vadd.f32 %v110, %v247
    %249 = vmatmul.f32.gmra.mxu0 %v186
    %v250 = vpop.f32.mrf.mxu0
    %v251 = vadd.f32 %v115, %v250
    %252 = vmatmul.f32.gmra.mxu0 %v189
    %v253 = vpop.f32.mrf.mxu0
    %v254 = vadd.f32 %v120, %v253
    %255 = vmatmul.f32.gmra.mxu0 %v192
    %v256 = vpop.f32.mrf.mxu0
    %v257 = vadd.f32 %v125, %v256
    %258 = vmatmul.f32.gmra.mxu0 %v195
    %v259 = vpop.f32.mrf.mxu0
    %v260 = vadd.f32 %v130, %v259
    %261 = vmatmul.f32.gmra.mxu0 %v198
    %v262 = vpop.f32.mrf.mxu0
    %v263 = vadd.f32 %v135, %v262
    %264 = vmatmul.f32.gmra.mxu0 %v201
    %v265 = vpop.f32.mrf.mxu0
    %v266 = vadd.f32 %v140, %v265
    %267 = vmatmul.f32.gmra.mxu0 %v204
    %v268 = vpop.f32.mrf.mxu0
    %v269 = vadd.f32 %v145, %v268
    %270 = vmatmul.f32.gmra.mxu0 %v207
    %v271 = vpop.f32.mrf.mxu0
    %v272 = vadd.f32 %v150, %v271
    %273 = vmatmul.f32.gmra.mxu0 %v210
    %v274 = vpop.f32.mrf.mxu0
    %v275 = vadd.f32 %v155, %v274
    %276 = vmatmul.f32.gmra.mxu0 %v213
    %v277 = vpop.f32.mrf.mxu0
    %v278 = vadd.f32 %v160, %v277
    %279 = vmatmul.f32.gmra.mxu0 %v216
    %v280 = vpop.f32.mrf.mxu0
    %v281 = vadd.f32 %v165, %v280
    %282 = vmatmul.f32.gmra.mxu0 %v219
    %v283 = vpop.f32.mrf.mxu0
    %v284 = vadd.f32 %v170, %v283
    %285 = vdwg.mxu0
    %v286 = vxor.u32 %v239, 2147483648
    %v287 = vxor.u32 %v242, 2147483648
    %v288 = vxor.u32 %v245, 2147483648
    %v289 = vxor.u32 %v248, 2147483648
    %v290 = vxor.u32 %v251, 2147483648
    %v291 = vxor.u32 %v254, 2147483648
    %v292 = vxor.u32 %v257, 2147483648
    %v293 = vxor.u32 %v260, 2147483648
    %v294 = vxor.u32 %v263, 2147483648
    %v295 = vxor.u32 %v266, 2147483648
    %v296 = vxor.u32 %v269, 2147483648
    %v297 = vxor.u32 %v272, 2147483648
    %v298 = vmul.f32 %v286, 1.442695
    %v299 = vpow.pop %v298
    %v300 = vmul.f32 %v287, 1.442695
    %v301 = vpow.pop %v300
    %v302 = vmul.f32 %v288, 1.442695
    %v303 = vpow.pop %v302
    %v304 = vmul.f32 %v289, 1.442695
    %v305 = vpow.pop %v304
    %v306 = vmul.f32 %v290, 1.442695
    %v307 = vpow.pop %v306
    %v308 = vmul.f32 %v291, 1.442695
    %v309 = vpow.pop %v308
    %v310 = vmul.f32 %v292, 1.442695
    %v311 = vpow.pop %v310
    %v312 = vmul.f32 %v293, 1.442695
    %v313 = vpow.pop %v312
    %v314 = vmul.f32 %v294, 1.442695
    %v315 = vpow.pop %v314
    %v316 = vmul.f32 %v295, 1.442695
    %v317 = vpow.pop %v316
    %v318 = vmul.f32 %v296, 1.442695
    %v319 = vpow.pop %v318
    %v320 = vmul.f32 %v297, 1.442695
    %v321 = vpow.pop %v320
    %v322 = vadd.f32 %v299, 1.0
    %v323 = vadd.f32 %v301, 1.0
    %v324 = vadd.f32 %v303, 1.0
    %v325 = vadd.f32 %v305, 1.0
    %v326 = vadd.f32 %v307, 1.0
    %v327 = vadd.f32 %v309, 1.0
    %v328 = vadd.f32 %v311, 1.0
    %v329 = vadd.f32 %v313, 1.0
    %v330 = vadd.f32 %v315, 1.0
    %v331 = vadd.f32 %v317, 1.0
    %v332 = vadd.f32 %v319, 1.0
    %v333 = vadd.f32 %v321, 1.0
    %v334 = vrcp.pop %v322
    %v335 = vmul.f32 %v322, %v334
    %v336 = vsub.f32 1.0, %v335
    %v337 = vmul.f32 %v334, %v336
    %v338 = vadd.f32 %v334, %v337
    %vm339 = vweird.f32 %v322
    %vm340 = vweird.f32 %v334
    %vm341 = vmor %vm339, %vm340
    %v342 = vsel %vm341, %v334, %v338
    %v343 = vand.u32 2147483647, %v322
    %vm344 = vcmp.eq.f32.partialorder %v343, 8.507059e+37
    %v345 = vand.u32 %v322, 2147483648
    %v346 = vor.u32 1.1754944e-38, %v345
    %v347 = vsel %vm344, %v346, %v342
    %v348 = vmul.f32 1.0, %v347
    %v349 = vrcp.pop %v323
    %v350 = vmul.f32 %v323, %v349
    %v351 = vsub.f32 1.0, %v350
    %v352 = vmul.f32 %v349, %v351
    %v353 = vadd.f32 %v349, %v352
    %vm354 = vweird.f32 %v323
    %vm355 = vweird.f32 %v349
    %vm356 = vmor %vm354, %vm355
    %v357 = vsel %vm356, %v349, %v353
    %v358 = vand.u32 2147483647, %v323
    %vm359 = vcmp.eq.f32.partialorder %v358, 8.507059e+37
    %v360 = vand.u32 %v323, 2147483648
    %v361 = vor.u32 1.1754944e-38, %v360
    %v362 = vsel %vm359, %v361, %v357
    %v363 = vmul.f32 1.0, %v362
    %v364 = vrcp.pop %v324
    %v365 = vmul.f32 %v324, %v364
    %v366 = vsub.f32 1.0, %v365
    %v367 = vmul.f32 %v364, %v366
    %v368 = vadd.f32 %v364, %v367
    %vm369 = vweird.f32 %v324
    %vm370 = vweird.f32 %v364
    %vm371 = vmor %vm369, %vm370
    %v372 = vsel %vm371, %v364, %v368
    %v373 = vand.u32 2147483647, %v324
    %vm374 = vcmp.eq.f32.partialorder %v373, 8.507059e+37
    %v375 = vand.u32 %v324, 2147483648
    %v376 = vor.u32 1.1754944e-38, %v375
    %v377 = vsel %vm374, %v376, %v372
    %v378 = vmul.f32 1.0, %v377
    %v379 = vrcp.pop %v325
    %v380 = vmul.f32 %v325, %v379
    %v381 = vsub.f32 1.0, %v380
    %v382 = vmul.f32 %v379, %v381
    %v383 = vadd.f32 %v379, %v382
    %vm384 = vweird.f32 %v325
    %vm385 = vweird.f32 %v379
    %vm386 = vmor %vm384, %vm385
    %v387 = vsel %vm386, %v379, %v383
    %v388 = vand.u32 2147483647, %v325
    %vm389 = vcmp.eq.f32.partialorder %v388, 8.507059e+37
    %v390 = vand.u32 %v325, 2147483648
    %v391 = vor.u32 1.1754944e-38, %v390
    %v392 = vsel %vm389, %v391, %v387
    %v393 = vmul.f32 1.0, %v392
    %v394 = vrcp.pop %v326
    %v395 = vmul.f32 %v326, %v394
    %v396 = vsub.f32 1.0, %v395
    %v397 = vmul.f32 %v394, %v396
    %v398 = vadd.f32 %v394, %v397
    %vm399 = vweird.f32 %v326
    %vm400 = vweird.f32 %v394
    %vm401 = vmor %vm399, %vm400
    %v402 = vsel %vm401, %v394, %v398
    %v403 = vand.u32 2147483647, %v326
    %vm404 = vcmp.eq.f32.partialorder %v403, 8.507059e+37
    %v405 = vand.u32 %v326, 2147483648
    %v406 = vor.u32 1.1754944e-38, %v405
    %v407 = vsel %vm404, %v406, %v402
    %v408 = vmul.f32 1.0, %v407
    %v409 = vrcp.pop %v327
    %v410 = vmul.f32 %v327, %v409
    %v411 = vsub.f32 1.0, %v410
    %v412 = vmul.f32 %v409, %v411
    %v413 = vadd.f32 %v409, %v412
    %vm414 = vweird.f32 %v327
    %vm415 = vweird.f32 %v409
    %vm416 = vmor %vm414, %vm415
    %v417 = vsel %vm416, %v409, %v413
    %v418 = vand.u32 2147483647, %v327
    %vm419 = vcmp.eq.f32.partialorder %v418, 8.507059e+37
    %v420 = vand.u32 %v327, 2147483648
    %v421 = vor.u32 1.1754944e-38, %v420
    %v422 = vsel %vm419, %v421, %v417
    %v423 = vmul.f32 1.0, %v422
    %v424 = vrcp.pop %v328
    %v425 = vmul.f32 %v328, %v424
    %v426 = vsub.f32 1.0, %v425
    %v427 = vmul.f32 %v424, %v426
    %v428 = vadd.f32 %v424, %v427
    %vm429 = vweird.f32 %v328
    %vm430 = vweird.f32 %v424
    %vm431 = vmor %vm429, %vm430
    %v432 = vsel %vm431, %v424, %v428
    %v433 = vand.u32 2147483647, %v328
    %vm434 = vcmp.eq.f32.partialorder %v433, 8.507059e+37
    %v435 = vand.u32 %v328, 2147483648
    %v436 = vor.u32 1.1754944e-38, %v435
    %v437 = vsel %vm434, %v436, %v432
    %v438 = vmul.f32 1.0, %v437
    %v439 = vrcp.pop %v329
    %v440 = vmul.f32 %v329, %v439
    %v441 = vsub.f32 1.0, %v440
    %v442 = vmul.f32 %v439, %v441
    %v443 = vadd.f32 %v439, %v442
    %vm444 = vweird.f32 %v329
    %vm445 = vweird.f32 %v439
    %vm446 = vmor %vm444, %vm445
    %v447 = vsel %vm446, %v439, %v443
    %v448 = vand.u32 2147483647, %v329
    %vm449 = vcmp.eq.f32.partialorder %v448, 8.507059e+37
    %v450 = vand.u32 %v329, 2147483648
    %v451 = vor.u32 1.1754944e-38, %v450
    %v452 = vsel %vm449, %v451, %v447
    %v453 = vmul.f32 1.0, %v452
    %v454 = vrcp.pop %v330
    %v455 = vmul.f32 %v330, %v454
    %v456 = vsub.f32 1.0, %v455
    %v457 = vmul.f32 %v454, %v456
    %v458 = vadd.f32 %v454, %v457
    %vm459 = vweird.f32 %v330
    %vm460 = vweird.f32 %v454
    %vm461 = vmor %vm459, %vm460
    %v462 = vsel %vm461, %v454, %v458
    %v463 = vand.u32 2147483647, %v330
    %vm464 = vcmp.eq.f32.partialorder %v463, 8.507059e+37
    %v465 = vand.u32 %v330, 2147483648
    %v466 = vor.u32 1.1754944e-38, %v465
    %v467 = vsel %vm464, %v466, %v462
    %v468 = vmul.f32 1.0, %v467
    %v469 = vrcp.pop %v331
    %v470 = vmul.f32 %v331, %v469
    %v471 = vsub.f32 1.0, %v470
    %v472 = vmul.f32 %v469, %v471
    %v473 = vadd.f32 %v469, %v472
    %vm474 = vweird.f32 %v331
    %vm475 = vweird.f32 %v469
    %vm476 = vmor %vm474, %vm475
    %v477 = vsel %vm476, %v469, %v473
    %v478 = vand.u32 2147483647, %v331
    %vm479 = vcmp.eq.f32.partialorder %v478, 8.507059e+37
    %v480 = vand.u32 %v331, 2147483648
    %v481 = vor.u32 1.1754944e-38, %v480
    %v482 = vsel %vm479, %v481, %v477
    %v483 = vmul.f32 1.0, %v482
    %v484 = vrcp.pop %v332
    %v485 = vmul.f32 %v332, %v484
    %v486 = vsub.f32 1.0, %v485
    %v487 = vmul.f32 %v484, %v486
    %v488 = vadd.f32 %v484, %v487
    %vm489 = vweird.f32 %v332
    %vm490 = vweird.f32 %v484
    %vm491 = vmor %vm489, %vm490
    %v492 = vsel %vm491, %v484, %v488
    %v493 = vand.u32 2147483647, %v332
    %vm494 = vcmp.eq.f32.partialorder %v493, 8.507059e+37
    %v495 = vand.u32 %v332, 2147483648
    %v496 = vor.u32 1.1754944e-38, %v495
    %v497 = vsel %vm494, %v496, %v492
    %v498 = vmul.f32 1.0, %v497
    %v499 = vrcp.pop %v333
    %v500 = vmul.f32 %v333, %v499
    %v501 = vsub.f32 1.0, %v500
    %v502 = vmul.f32 %v499, %v501
    %v503 = vadd.f32 %v499, %v502
    %vm504 = vweird.f32 %v333
    %vm505 = vweird.f32 %v499
    %vm506 = vmor %vm504, %vm505
    %v507 = vsel %vm506, %v499, %v503
    %v508 = vand.u32 2147483647, %v333
    %vm509 = vcmp.eq.f32.partialorder %v508, 8.507059e+37
    %v510 = vand.u32 %v333, 2147483648
    %v511 = vor.u32 1.1754944e-38, %v510
    %v512 = vsel %vm509, %v511, %v507
    %v513 = vmul.f32 1.0, %v512
    %v514 = vtanh.pop %v275
    %v515 = vtanh.pop %v278
    %v516 = vtanh.pop %v281
    %v517 = vtanh.pop %v284
    %v518 = vmul.f32 %v408, %v56
    %v519 = vmul.f32 %v423, %v57
    %v520 = vmul.f32 %v438, %v58
    %v521 = vmul.f32 %v453, %v59
    %v522 = vmul.f32 %v348, %v514
    %v523 = vmul.f32 %v363, %v515
    %v524 = vmul.f32 %v378, %v516
    %v525 = vmul.f32 %v393, %v517
    %v526 = vadd.f32 %v518, %v522
    %v527 = vadd.f32 %v519, %v523
    %v528 = vadd.f32 %v520, %v524
    %v529 = vadd.f32 %v521, %v525
    %v530 = vtanh.pop %v526
    %v531 = vtanh.pop %v527
    %v532 = vtanh.pop %v528
    %v533 = vtanh.pop %v529
    %v534 = vmul.f32 %v468, %v530
    %v535 = vmul.f32 %v483, %v531
    %v536 = vmul.f32 %v498, %v532
    %v537 = vmul.f32 %v513, %v533
    %538 = vst [vmem:[#allocation4] sm:$0xff] %v534
    %539 = vst [vmem:[#allocation4 + $0x8] sm:$0xff] %v535
    %540 = vst [vmem:[#allocation4 + $0x10] sm:$0xff] %v536
    %541 = vst [vmem:[#allocation4 + $0x18] sm:$0xff] %v537
    %542 = vst [vmem:[#allocation6] sm:$0xff] %v526
    %543 = vst [vmem:[#allocation6 + $0x8] sm:$0xff] %v527
    %544 = vst [vmem:[#allocation6 + $0x10] sm:$0xff] %v528
    %545 = vst [vmem:[#allocation6 + $0x18] sm:$0xff] %v529
    %s546 = scalar_lea.vmem %s1, 32
    %v547 = vld [vmem:[%s546] sm:$0xff]
    %v548 = vld [vmem:[%s546 + $0x8] sm:$0xff]
    %v549 = vld [vmem:[%s546 + $0x10] sm:$0xff]
    %v550 = vld [vmem:[%s546 + $0x18] sm:$0xff]
    %s551 = scalar_lea.vmem %s2, 32
    %v552 = vld [vmem:[%s551] sm:$0xff]
    %v553 = vld [vmem:[%s551 + $0x8] sm:$0xff]
    %v554 = vld [vmem:[%s551 + $0x10] sm:$0xff]
    %v555 = vld [vmem:[%s551 + $0x18] sm:$0xff]
    %v556 = vld [vmem:[%s5] sm:$0xff]
    %v557 = vld [vmem:[%s5 + $0x8] sm:$0xff]
    %v558 = vld [vmem:[%s5 + $0x10] sm:$0xff]
    %v559 = vld [vmem:[%s5 + $0x18] sm:$0xff]
    %v560 = vld [vmem:[%s5 + $0x20] sm:$0xff]
    %v561 = vld [vmem:[%s5 + $0x28] sm:$0xff]
    %v562 = vld [vmem:[%s5 + $0x30] sm:$0xff]
    %v563 = vld [vmem:[%s5 + $0x38] sm:$0xff]
    %v564 = vld [vmem:[%s5 + $0x40] sm:$0xff]
    %v565 = vld [vmem:[%s5 + $0x48] sm:$0xff]
    %v566 = vld [vmem:[%s5 + $0x50] sm:$0xff]
    %v567 = vld [vmem:[%s5 + $0x58] sm:$0xff]
    %v568 = vld [vmem:[%s5 + $0x60] sm:$0xff]
    %v569 = vld [vmem:[%s5 + $0x68] sm:$0xff]
    %v570 = vld [vmem:[%s5 + $0x70] sm:$0xff]
    %v571 = vld [vmem:[%s5 + $0x78] sm:$0xff]
    %v572 = vld [vmem:[%s6] sm:$0xff]
    %v573 = vld [vmem:[%s6 + $0x8] sm:$0xff]
    %v574 = vld [vmem:[%s6 + $0x10] sm:$0xff]
    %v575 = vld [vmem:[%s6 + $0x18] sm:$0xff]
    %v576 = vld [vmem:[%s6 + $0x20] sm:$0xff]
    %v577 = vld [vmem:[%s6 + $0x28] sm:$0xff]
    %v578 = vld [vmem:[%s6 + $0x30] sm:$0xff]
    %v579 = vld [vmem:[%s6 + $0x38] sm:$0xff]
    %v580 = vld [vmem:[%s6 + $0x40] sm:$0xff]
    %v581 = vld [vmem:[%s6 + $0x48] sm:$0xff]
    %v582 = vld [vmem:[%s6 + $0x50] sm:$0xff]
    %v583 = vld [vmem:[%s6 + $0x58] sm:$0xff]
    %v584 = vld [vmem:[%s6 + $0x60] sm:$0xff]
    %v585 = vld [vmem:[%s6 + $0x68] sm:$0xff]
    %v586 = vld [vmem:[%s6 + $0x70] sm:$0xff]
    %v587 = vld [vmem:[%s6 + $0x78] sm:$0xff]
    %589 = vset.pattern.permute.xlu0 0
    %590 = vperm.xlu0 %589, %v572
    %v591 = vpop.permute.xlu0 %590
    %594 = vset.pattern.permute.xlu0 0
    %595 = vperm.xlu0 %594, %v573
    %v596 = vpop.permute.xlu0 %595
    %599 = vset.pattern.permute.xlu0 0
    %600 = vperm.xlu0 %599, %v574
    %v601 = vpop.permute.xlu0 %600
    %604 = vset.pattern.permute.xlu0 0
    %605 = vperm.xlu0 %604, %v575
    %v606 = vpop.permute.xlu0 %605
    %609 = vset.pattern.permute.xlu0 0
    %610 = vperm.xlu0 %609, %v576
    %v611 = vpop.permute.xlu0 %610
    %614 = vset.pattern.permute.xlu0 0
    %615 = vperm.xlu0 %614, %v577
    %v616 = vpop.permute.xlu0 %615
    %619 = vset.pattern.permute.xlu0 0
    %620 = vperm.xlu0 %619, %v578
    %v621 = vpop.permute.xlu0 %620
    %624 = vset.pattern.permute.xlu0 0
    %625 = vperm.xlu0 %624, %v579
    %v626 = vpop.permute.xlu0 %625
    %629 = vset.pattern.permute.xlu0 0
    %630 = vperm.xlu0 %629, %v580
    %v631 = vpop.permute.xlu0 %630
    %634 = vset.pattern.permute.xlu0 0
    %635 = vperm.xlu0 %634, %v581
    %v636 = vpop.permute.xlu0 %635
    %639 = vset.pattern.permute.xlu0 0
    %640 = vperm.xlu0 %639, %v582
    %v641 = vpop.permute.xlu0 %640
    %644 = vset.pattern.permute.xlu0 0
    %645 = vperm.xlu0 %644, %v583
    %v646 = vpop.permute.xlu0 %645
    %649 = vset.pattern.permute.xlu0 0
    %650 = vperm.xlu0 %649, %v584
    %v651 = vpop.permute.xlu0 %650
    %654 = vset.pattern.permute.xlu0 0
    %655 = vperm.xlu0 %654, %v585
    %v656 = vpop.permute.xlu0 %655
    %659 = vset.pattern.permute.xlu0 0
    %660 = vperm.xlu0 %659, %v586
    %v661 = vpop.permute.xlu0 %660
    %664 = vset.pattern.permute.xlu0 0
    %665 = vperm.xlu0 %664, %v587
    %v666 = vpop.permute.xlu0 %665
    %vm668 = vcmask 523264
    %v670 = vsel %vm668, %v556, 0
    %v673 = vsel %vm668, %v557, 0
    %v676 = vsel %vm668, %v558, 0
    %v679 = vsel %vm668, %v559, 0
    %v682 = vsel %vm668, %v560, 0
    %v685 = vsel %vm668, %v561, 0
    %v688 = vsel %vm668, %v562, 0
    %v691 = vsel %vm668, %v563, 0
    %v694 = vsel %vm668, %v564, 0
    %v697 = vsel %vm668, %v565, 0
    %v700 = vsel %vm668, %v566, 0
    %v703 = vsel %vm668, %v567, 0
    %v706 = vsel %vm668, %v568, 0
    %v709 = vsel %vm668, %v569, 0
    %v712 = vsel %vm668, %v570, 0
    %v715 = vsel %vm668, %v571, 0
    %717 = vmatpush.msra.mxu0 0.0
    %718 = vmatpush.msra.mxu0 0.0
    %719 = vmatpush.msra.mxu0 0.0
    %720 = vmatpush.msra.mxu0 0.0
    %721 = vmatpush.msra.mxu0 0.0
    %722 = vmatpush.msra.mxu0 0.0
    %723 = vmatpush.msra.mxu0 0.0
    %724 = vmatpush.msra.mxu0 0.0
    %725 = vmatpush.msra.mxu0 %v550
    %726 = vmatpush.msra.mxu0 %v549
    %727 = vmatpush.msra.mxu0 %v548
    %728 = vmatpush.msra.mxu0 %v547
    %729 = vmatpush.msra.mxu0 %v537
    %730 = vmatpush.msra.mxu0 %v536
    %731 = vmatpush.msra.mxu0 %v535
    %732 = vmatpush.msra.mxu0 %v534
    %733 = vmatmul.f32.gmra.mxu0 %v670
    %v734 = vpop.f32.mrf.mxu0
    %v735 = vadd.f32 %v591, %v734
    %736 = vmatmul.f32.gmra.mxu0 %v673
    %v737 = vpop.f32.mrf.mxu0
    %v738 = vadd.f32 %v596, %v737
    %739 = vmatmul.f32.gmra.mxu0 %v676
    %v740 = vpop.f32.mrf.mxu0
    %v741 = vadd.f32 %v601, %v740
    %742 = vmatmul.f32.gmra.mxu0 %v679
    %v743 = vpop.f32.mrf.mxu0
    %v744 = vadd.f32 %v606, %v743
    %745 = vmatmul.f32.gmra.mxu0 %v682
    %v746 = vpop.f32.mrf.mxu0
    %v747 = vadd.f32 %v611, %v746
    %748 = vmatmul.f32.gmra.mxu0 %v685
    %v749 = vpop.f32.mrf.mxu0
    %v750 = vadd.f32 %v616, %v749
    %751 = vmatmul.f32.gmra.mxu0 %v688
    %v752 = vpop.f32.mrf.mxu0
    %v753 = vadd.f32 %v621, %v752
    %754 = vmatmul.f32.gmra.mxu0 %v691
    %v755 = vpop.f32.mrf.mxu0
    %v756 = vadd.f32 %v626, %v755
    %757 = vmatmul.f32.gmra.mxu0 %v694
    %v758 = vpop.f32.mrf.mxu0
    %v759 = vadd.f32 %v631, %v758
    %760 = vmatmul.f32.gmra.mxu0 %v697
    %v761 = vpop.f32.mrf.mxu0
    %v762 = vadd.f32 %v636, %v761
    %763 = vmatmul.f32.gmra.mxu0 %v700
    %v764 = vpop.f32.mrf.mxu0
    %v765 = vadd.f32 %v641, %v764
    %766 = vmatmul.f32.gmra.mxu0 %v703
    %v767 = vpop.f32.mrf.mxu0
    %v768 = vadd.f32 %v646, %v767
    %769 = vmatmul.f32.gmra.mxu0 %v706
    %v770 = vpop.f32.mrf.mxu0
    %v771 = vadd.f32 %v651, %v770
    %772 = vmatmul.f32.gmra.mxu0 %v709
    %v773 = vpop.f32.mrf.mxu0
    %v774 = vadd.f32 %v656, %v773
    %775 = vmatmul.f32.gmra.mxu0 %v712
    %v776 = vpop.f32.mrf.mxu0
    %v777 = vadd.f32 %v661, %v776
    %778 = vmatmul.f32.gmra.mxu0 %v715
    %v779 = vpop.f32.mrf.mxu0
    %v780 = vadd.f32 %v666, %v779
    %781 = vdwg.mxu0
    %v782 = vxor.u32 %v735, 2147483648
    %v783 = vxor.u32 %v738, 2147483648
    %v784 = vxor.u32 %v741, 2147483648
    %v785 = vxor.u32 %v744, 2147483648
    %v786 = vxor.u32 %v747, 2147483648
    %v787 = vxor.u32 %v750, 2147483648
    %v788 = vxor.u32 %v753, 2147483648
    %v789 = vxor.u32 %v756, 2147483648
    %v790 = vxor.u32 %v759, 2147483648
    %v791 = vxor.u32 %v762, 2147483648
    %v792 = vxor.u32 %v765, 2147483648
    %v793 = vxor.u32 %v768, 2147483648
    %v794 = vmul.f32 %v782, 1.442695
    %v795 = vpow.pop %v794
    %v796 = vmul.f32 %v783, 1.442695
    %v797 = vpow.pop %v796
    %v798 = vmul.f32 %v784, 1.442695
    %v799 = vpow.pop %v798
    %v800 = vmul.f32 %v785, 1.442695
    %v801 = vpow.pop %v800
    %v802 = vmul.f32 %v786, 1.442695
    %v803 = vpow.pop %v802
    %v804 = vmul.f32 %v787, 1.442695
    %v805 = vpow.pop %v804
    %v806 = vmul.f32 %v788, 1.442695
    %v807 = vpow.pop %v806
    %v808 = vmul.f32 %v789, 1.442695
    %v809 = vpow.pop %v808
    %v810 = vmul.f32 %v790, 1.442695
    %v811 = vpow.pop %v810
    %v812 = vmul.f32 %v791, 1.442695
    %v813 = vpow.pop %v812
    %v814 = vmul.f32 %v792, 1.442695
    %v815 = vpow.pop %v814
    %v816 = vmul.f32 %v793, 1.442695
    %v817 = vpow.pop %v816
    %v818 = vadd.f32 %v795, 1.0
    %v819 = vadd.f32 %v797, 1.0
    %v820 = vadd.f32 %v799, 1.0
    %v821 = vadd.f32 %v801, 1.0
    %v822 = vadd.f32 %v803, 1.0
    %v823 = vadd.f32 %v805, 1.0
    %v824 = vadd.f32 %v807, 1.0
    %v825 = vadd.f32 %v809, 1.0
    %v826 = vadd.f32 %v811, 1.0
    %v827 = vadd.f32 %v813, 1.0
    %v828 = vadd.f32 %v815, 1.0
    %v829 = vadd.f32 %v817, 1.0
    %v830 = vrcp.pop %v818
    %v831 = vmul.f32 %v818, %v830
    %v832 = vsub.f32 1.0, %v831
    %v833 = vmul.f32 %v830, %v832
    %v834 = vadd.f32 %v830, %v833
    %vm835 = vweird.f32 %v818
    %vm836 = vweird.f32 %v830
    %vm837 = vmor %vm835, %vm836
    %v838 = vsel %vm837, %v830, %v834
    %v839 = vand.u32 2147483647, %v818
    %vm840 = vcmp.eq.f32.partialorder %v839, 8.507059e+37
    %v841 = vand.u32 %v818, 2147483648
    %v842 = vor.u32 1.1754944e-38, %v841
    %v843 = vsel %vm840, %v842, %v838
    %v844 = vmul.f32 1.0, %v843
    %v845 = vrcp.pop %v819
    %v846 = vmul.f32 %v819, %v845
    %v847 = vsub.f32 1.0, %v846
    %v848 = vmul.f32 %v845, %v847
    %v849 = vadd.f32 %v845, %v848
    %vm850 = vweird.f32 %v819
    %vm851 = vweird.f32 %v845
    %vm852 = vmor %vm850, %vm851
    %v853 = vsel %vm852, %v845, %v849
    %v854 = vand.u32 2147483647, %v819
    %vm855 = vcmp.eq.f32.partialorder %v854, 8.507059e+37
    %v856 = vand.u32 %v819, 2147483648
    %v857 = vor.u32 1.1754944e-38, %v856
    %v858 = vsel %vm855, %v857, %v853
    %v859 = vmul.f32 1.0, %v858
    %v860 = vrcp.pop %v820
    %v861 = vmul.f32 %v820, %v860
    %v862 = vsub.f32 1.0, %v861
    %v863 = vmul.f32 %v860, %v862
    %v864 = vadd.f32 %v860, %v863
    %vm865 = vweird.f32 %v820
    %vm866 = vweird.f32 %v860
    %vm867 = vmor %vm865, %vm866
    %v868 = vsel %vm867, %v860, %v864
    %v869 = vand.u32 2147483647, %v820
    %vm870 = vcmp.eq.f32.partialorder %v869, 8.507059e+37
    %v871 = vand.u32 %v820, 2147483648
    %v872 = vor.u32 1.1754944e-38, %v871
    %v873 = vsel %vm870, %v872, %v868
    %v874 = vmul.f32 1.0, %v873
    %v875 = vrcp.pop %v821
    %v876 = vmul.f32 %v821, %v875
    %v877 = vsub.f32 1.0, %v876
    %v878 = vmul.f32 %v875, %v877
    %v879 = vadd.f32 %v875, %v878
    %vm880 = vweird.f32 %v821
    %vm881 = vweird.f32 %v875
    %vm882 = vmor %vm880, %vm881
    %v883 = vsel %vm882, %v875, %v879
    %v884 = vand.u32 2147483647, %v821
    %vm885 = vcmp.eq.f32.partialorder %v884, 8.507059e+37
    %v886 = vand.u32 %v821, 2147483648
    %v887 = vor.u32 1.1754944e-38, %v886
    %v888 = vsel %vm885, %v887, %v883
    %v889 = vmul.f32 1.0, %v888
    %v890 = vrcp.pop %v822
    %v891 = vmul.f32 %v822, %v890
    %v892 = vsub.f32 1.0, %v891
    %v893 = vmul.f32 %v890, %v892
    %v894 = vadd.f32 %v890, %v893
    %vm895 = vweird.f32 %v822
    %vm896 = vweird.f32 %v890
    %vm897 = vmor %vm895, %vm896
    %v898 = vsel %vm897, %v890, %v894
    %v899 = vand.u32 2147483647, %v822
    %vm900 = vcmp.eq.f32.partialorder %v899, 8.507059e+37
    %v901 = vand.u32 %v822, 2147483648
    %v902 = vor.u32 1.1754944e-38, %v901
    %v903 = vsel %vm900, %v902, %v898
    %v904 = vmul.f32 1.0, %v903
    %v905 = vrcp.pop %v823
    %v906 = vmul.f32 %v823, %v905
    %v907 = vsub.f32 1.0, %v906
    %v908 = vmul.f32 %v905, %v907
    %v909 = vadd.f32 %v905, %v908
    %vm910 = vweird.f32 %v823
    %vm911 = vweird.f32 %v905
    %vm912 = vmor %vm910, %vm911
    %v913 = vsel %vm912, %v905, %v909
    %v914 = vand.u32 2147483647, %v823
    %vm915 = vcmp.eq.f32.partialorder %v914, 8.507059e+37
    %v916 = vand.u32 %v823, 2147483648
    %v917 = vor.u32 1.1754944e-38, %v916
    %v918 = vsel %vm915, %v917, %v913
    %v919 = vmul.f32 1.0, %v918
    %v920 = vrcp.pop %v824
    %v921 = vmul.f32 %v824, %v920
    %v922 = vsub.f32 1.0, %v921
    %v923 = vmul.f32 %v920, %v922
    %v924 = vadd.f32 %v920, %v923
    %vm925 = vweird.f32 %v824
    %vm926 = vweird.f32 %v920
    %vm927 = vmor %vm925, %vm926
    %v928 = vsel %vm927, %v920, %v924
    %v929 = vand.u32 2147483647, %v824
    %vm930 = vcmp.eq.f32.partialorder %v929, 8.507059e+37
    %v931 = vand.u32 %v824, 2147483648
    %v932 = vor.u32 1.1754944e-38, %v931
    %v933 = vsel %vm930, %v932, %v928
    %v934 = vmul.f32 1.0, %v933
    %v935 = vrcp.pop %v825
    %v936 = vmul.f32 %v825, %v935
    %v937 = vsub.f32 1.0, %v936
    %v938 = vmul.f32 %v935, %v937
    %v939 = vadd.f32 %v935, %v938
    %vm940 = vweird.f32 %v825
    %vm941 = vweird.f32 %v935
    %vm942 = vmor %vm940, %vm941
    %v943 = vsel %vm942, %v935, %v939
    %v944 = vand.u32 2147483647, %v825
    %vm945 = vcmp.eq.f32.partialorder %v944, 8.507059e+37
    %v946 = vand.u32 %v825, 2147483648
    %v947 = vor.u32 1.1754944e-38, %v946
    %v948 = vsel %vm945, %v947, %v943
    %v949 = vmul.f32 1.0, %v948
    %v950 = vrcp.pop %v826
    %v951 = vmul.f32 %v826, %v950
    %v952 = vsub.f32 1.0, %v951
    %v953 = vmul.f32 %v950, %v952
    %v954 = vadd.f32 %v950, %v953
    %vm955 = vweird.f32 %v826
    %vm956 = vweird.f32 %v950
    %vm957 = vmor %vm955, %vm956
    %v958 = vsel %vm957, %v950, %v954
    %v959 = vand.u32 2147483647, %v826
    %vm960 = vcmp.eq.f32.partialorder %v959, 8.507059e+37
    %v961 = vand.u32 %v826, 2147483648
    %v962 = vor.u32 1.1754944e-38, %v961
    %v963 = vsel %vm960, %v962, %v958
    %v964 = vmul.f32 1.0, %v963
    %v965 = vrcp.pop %v827
    %v966 = vmul.f32 %v827, %v965
    %v967 = vsub.f32 1.0, %v966
    %v968 = vmul.f32 %v965, %v967
    %v969 = vadd.f32 %v965, %v968
    %vm970 = vweird.f32 %v827
    %vm971 = vweird.f32 %v965
    %vm972 = vmor %vm970, %vm971
    %v973 = vsel %vm972, %v965, %v969
    %v974 = vand.u32 2147483647, %v827
    %vm975 = vcmp.eq.f32.partialorder %v974, 8.507059e+37
    %v976 = vand.u32 %v827, 2147483648
    %v977 = vor.u32 1.1754944e-38, %v976
    %v978 = vsel %vm975, %v977, %v973
    %v979 = vmul.f32 1.0, %v978
    %v980 = vrcp.pop %v828
    %v981 = vmul.f32 %v828, %v980
    %v982 = vsub.f32 1.0, %v981
    %v983 = vmul.f32 %v980, %v982
    %v984 = vadd.f32 %v980, %v983
    %vm985 = vweird.f32 %v828
    %vm986 = vweird.f32 %v980
    %vm987 = vmor %vm985, %vm986
    %v988 = vsel %vm987, %v980, %v984
    %v989 = vand.u32 2147483647, %v828
    %vm990 = vcmp.eq.f32.partialorder %v989, 8.507059e+37
    %v991 = vand.u32 %v828, 2147483648
    %v992 = vor.u32 1.1754944e-38, %v991
    %v993 = vsel %vm990, %v992, %v988
    %v994 = vmul.f32 1.0, %v993
    %v995 = vrcp.pop %v829
    %v996 = vmul.f32 %v829, %v995
    %v997 = vsub.f32 1.0, %v996
    %v998 = vmul.f32 %v995, %v997
    %v999 = vadd.f32 %v995, %v998
    %vm1000 = vweird.f32 %v829
    %vm1001 = vweird.f32 %v995
    %vm1002 = vmor %vm1000, %vm1001
    %v1003 = vsel %vm1002, %v995, %v999
    %v1004 = vand.u32 2147483647, %v829
    %vm1005 = vcmp.eq.f32.partialorder %v1004, 8.507059e+37
    %v1006 = vand.u32 %v829, 2147483648
    %v1007 = vor.u32 1.1754944e-38, %v1006
    %v1008 = vsel %vm1005, %v1007, %v1003
    %v1009 = vmul.f32 1.0, %v1008
    %v1010 = vtanh.pop %v771
    %v1011 = vtanh.pop %v774
    %v1012 = vtanh.pop %v777
    %v1013 = vtanh.pop %v780
    %v1014 = vmul.f32 %v904, %v552
    %v1015 = vmul.f32 %v919, %v553
    %v1016 = vmul.f32 %v934, %v554
    %v1017 = vmul.f32 %v949, %v555
    %v1018 = vmul.f32 %v844, %v1010
    %v1019 = vmul.f32 %v859, %v1011
    %v1020 = vmul.f32 %v874, %v1012
    %v1021 = vmul.f32 %v889, %v1013
    %v1022 = vadd.f32 %v1014, %v1018
    %v1023 = vadd.f32 %v1015, %v1019
    %v1024 = vadd.f32 %v1016, %v1020
    %v1025 = vadd.f32 %v1017, %v1021
    %v1026 = vtanh.pop %v1022
    %v1027 = vtanh.pop %v1023
    %v1028 = vtanh.pop %v1024
    %v1029 = vtanh.pop %v1025
    %v1030 = vmul.f32 %v964, %v1026
    %v1031 = vmul.f32 %v979, %v1027
    %v1032 = vmul.f32 %v994, %v1028
    %v1033 = vmul.f32 %v1009, %v1029
    %s1034 = scalar_lea.vmem [#allocation4], 32
    %1035 = vst [vmem:[%s1034] sm:$0xff] %v1030
    %1036 = vst [vmem:[%s1034 + $0x8] sm:$0xff] %v1031
    %1037 = vst [vmem:[%s1034 + $0x10] sm:$0xff] %v1032
    %1038 = vst [vmem:[%s1034 + $0x18] sm:$0xff] %v1033
    %s1039 = scalar_lea.vmem [#allocation6], 32
    %1040 = vst [vmem:[%s1039] sm:$0xff] %v1022
    %1041 = vst [vmem:[%s1039 + $0x8] sm:$0xff] %v1023
    %1042 = vst [vmem:[%s1039 + $0x10] sm:$0xff] %v1024
    %1043 = vst [vmem:[%s1039 + $0x18] sm:$0xff] %v1025
    %v1044 = vld [vmem:[%s7] sm:$0xf]
    %v1045 = vld [vmem:[%s8] sm:$0xf]
    %1047 = vset.pattern.permute.xlu0 0
    %1048 = vperm.xlu0 %1047, %v1045
    %v1049 = vpop.permute.xlu0 %1048
    %vm1051 = vcmask 261120
    %v1053 = vsel %vm1051, %v1044, 0
    %1055 = vmatpush.msra.mxu0 0.0
    %1056 = vmatpush.msra.mxu0 0.0
    %1057 = vmatpush.msra.mxu0 0.0
    %1058 = vmatpush.msra.mxu0 0.0
    %1059 = vmatpush.msra.mxu0 0.0
    %1060 = vmatpush.msra.mxu0 0.0
    %1061 = vmatpush.msra.mxu0 0.0
    %1062 = vmatpush.msra.mxu0 0.0
    %1063 = vmatpush.msra.mxu0 0.0
    %1064 = vmatpush.msra.mxu0 0.0
    %1065 = vmatpush.msra.mxu0 0.0
    %1066 = vmatpush.msra.mxu0 0.0
    %1067 = vmatpush.msra.mxu0 %v1033
    %1068 = vmatpush.msra.mxu0 %v1032
    %1069 = vmatpush.msra.mxu0 %v1031
    %1070 = vmatpush.msra.mxu0 %v1030
    %1071 = vmatmul.f32.gmra.mxu0 %v1053
    %v1072 = vpop.f32.mrf.mxu0
    %v1073 = vadd.f32 %v1049, %v1072
    %1074 = vdwg.mxu0
    %1075 = vst [vmem:[#allocation2] sm:$0xf] %v1073
    // Predicated region
    $region38: #{tpu_custom_call.1} parent=1 // pred_check
      _
    $region39: #{tpu_custom_call.1} parent=1 // pred_check_branch
      %1077 = sbr.rel (0) target = $region41
    $region40: #{tpu_custom_call.1} parent=1 // pred_region
      %1079 = vsyncadd [#allocation3], 0
      %s1081 = sshll.u32 [#allocation2], 4
      %s1082 = int_to_ptr.vmem [resolvable:$true] %s1081
      %s1083 = sshll.u32 %s9, 4
      %s1084 = int_to_ptr.hbm [resolvable:$true] %s1083
      %1086 = dma.vmem_to_hbm [thread:$0]  %s1082, 64, %s1084, [#allocation3]
    $region41: #{tpu_custom_call.1} parent=1 // pred_fallthru
      _
    // Predicated region
    $region42: #{tpu_custom_call.1} parent=1 // pred_check
      _
    $region43: #{tpu_custom_call.1} parent=1 // pred_check_branch
      %1088 = sbr.rel (0) target = $region45
    $region44: #{tpu_custom_call.1} parent=1 // pred_region
      %1090 = vsyncadd [#allocation5], 0
      %s1091 = sshll.u32 [#allocation4], 4
      %s1092 = int_to_ptr.vmem [resolvable:$true] %s1091
      %s1093 = sshll.u32 %s10, 4
      %s1094 = int_to_ptr.hbm [resolvable:$true] %s1093
      %1099 = dma.vmem_to_hbm [thread:$0]  %s1092, 1024, %s1094, [#allocation5], 128, 128, 8
    $region45: #{tpu_custom_call.1} parent=1 // pred_fallthru
      _
    // Predicated region
    $region46: #{tpu_custom_call.1} parent=1 // pred_check
      _
    $region47: #{tpu_custom_call.1} parent=1 // pred_check_branch
      %1101 = sbr.rel (0) target = $region49
    $region48: #{tpu_custom_call.1} parent=1 // pred_region
      %1103 = vsyncadd [#allocation5], 0
      %s1104 = sshll.u32 [#allocation6], 4
      %s1105 = int_to_ptr.vmem [resolvable:$true] %s1104
      %s1106 = sshll.u32 %s11, 4
      %s1107 = int_to_ptr.hbm [resolvable:$true] %s1106
      %1112 = dma.vmem_to_hbm [thread:$0]  %s1105, 1024, %s1107, [#allocation5], 128, 128, 8
    $region49: #{tpu_custom_call.1} parent=1 // pred_fallthru
      _
    // Predicated region
    $region50: #{tpu_custom_call.1} parent=1 // pred_check
      _
    $region51: #{tpu_custom_call.1} parent=1 // pred_check_branch
      %1114 = sbr.rel (0) target = $region53
    $region52: #{tpu_custom_call.1} parent=1 // pred_region
      %1116 = dma.done [#allocation3], 64
    $region53: #{tpu_custom_call.1} parent=1 // pred_fallthru
      _
    // Predicated region
    $region54: #{tpu_custom_call.1} parent=1 // pred_check
      _
    $region55: #{tpu_custom_call.1} parent=1 // pred_check_branch
      %1118 = sbr.rel (0) target = $region57
    $region56: #{tpu_custom_call.1} parent=1 // pred_region
      %1120 = dma.done [#allocation5], 1024
    $region57: #{tpu_custom_call.1} parent=1 // pred_fallthru
      _
    // Predicated region
    $region58: #{tpu_custom_call.1} parent=1 // pred_check
      _
    $region59: #{tpu_custom_call.1} parent=1 // pred_check_branch
      %1122 = sbr.rel (0) target = $region61
    $region60: #{tpu_custom_call.1} parent=1 // pred_region
      %1124 = dma.done [#allocation5], 1024
    $region61: #{tpu_custom_call.1} parent=1 // pred_fallthru
      _
    %1125 = vsyncpa [#allocation3], 1
    %1126 = vsyncpa [#allocation5], 1

</llo_original>
